<compile_context>
chip_gen: v5e
topology: v5e:2x2
jax: 0.10.0
libtpu: 0.0.40
codegen_flags: <defaults>
</compile_context>

<pallas_src>
import numpy as np
import jax
import jax.numpy as jnp
from jax import lax
from jax.experimental import pallas as pl
from jax.experimental.pallas import tpu as pltpu


def _width_selector(W):
    """S[kw, w_in, w_out] = 1 iff w_in == w_out + kw - 1 and 0 <= w_in < W."""
    S = np.zeros((3, W, W), np.float32)
    for kw in range(3):
        for wo in range(W):
            wi = wo + kw - 1
            if 0 <= wi < W:
                S[kw, wi, wo] = 1.0
    return jnp.asarray(S)


def _conv_toeplitz(w_oihw, W, S):
    """(O, I, 3, 3) -> (3, W*I, W*O) banded slabs.

    T[kh, w_in*I + ci, w_out*O + co] = w[co, ci, kh, w_in - w_out + 1]
    (zero outside the 3-wide band / outside [0, W), i.e. padding is baked in).
    """
    O, I, KH, _ = w_oihw.shape
    wt = jnp.transpose(w_oihw, (2, 3, 1, 0)).astype(jnp.float32)   # (kh, kw, I, O)
    T = jnp.einsum('kaw,hkio->haiwo', S, wt)                        # (3, W, I, W, O)
    return T.reshape(KH, W * I, W * O)


def basic_block_forward(x_nchw, w1, b1, w2, b2):
    """x: (B, Cin, H, W); w1: (Chid, Cin, 3, 3); b1: (Chid,);
    w2: (Cout, Chid, 3, 3); b2: (Cout,). Returns (B, Cout, H//2, W//2)."""
    B, Cin, H, W = x_nchw.shape
    Chid = w1.shape[0]
    Cout = w2.shape[0]
    assert H % 2 == 0 and W % 2 == 0 and H >= 2 and W >= 2

    # ---- wrapper-side layout plumbing (all XLA, layout only) ----
    x_flat = jnp.transpose(x_nchw, (0, 2, 3, 1)).reshape(B, H, W * Cin)
    x_flat = x_flat.astype(jnp.float32)
    x_pad = jnp.pad(x_flat, ((0, 0), (1, 1), (0, 0)))          # H zero-pad only

    S = _width_selector(W)
    t1 = _conv_toeplitz(w1, W, S)                               # (3, W*Cin,  W*Chid)
    t2 = _conv_toeplitz(w2, W, S)                               # (3, W*Chid, W*Cout)
    b1r = jnp.tile(b1.astype(jnp.float32), W).reshape(1, W * Chid)
    b2r = jnp.tile(b2.astype(jnp.float32), W).reshape(1, W * Cout)

    def kernel(xp_ref, t1_ref, b1_ref, t2_ref, b2_ref, o_ref):
        # xp_ref: (H+2, W*Cin)   H-padded input, lanes = w*Cin + ci
        # t1_ref: (3, W*Cin, W*Chid); b1_ref: (1, W*Chid)
        # t2_ref: (3, W*Chid, W*Cout); b2_ref: (1, W*Cout)
        # o_ref : (H-1, (W-1)*Cout)  wide pooled result (even rows / even
        #                            w-groups hold the 2x2 maxima)
        # ---- conv1 (3x3, pad=1): 3 lane-dense matmuls, one per kernel row ----
        acc1 = jnp.dot(xp_ref[0:H, :], t1_ref[0],
                       preferred_element_type=jnp.float32)
        acc1 = acc1 + jnp.dot(xp_ref[1:H + 1, :], t1_ref[1],
                              preferred_element_type=jnp.float32)
        acc1 = acc1 + jnp.dot(xp_ref[2:H + 2, :], t1_ref[2],
                              preferred_element_type=jnp.float32)
        y1 = jnp.maximum(acc1 + b1_ref[...], 0.0)               # (H, W*Chid)

        # zero-pad along H for conv2 (W padding is baked into t2)
        zrow = jnp.zeros((1, W * Chid), jnp.float32)
        y1p = jnp.concatenate([zrow, y1, zrow], axis=0)         # (H+2, W*Chid)

        # ---- conv2 (3x3, pad=1) ----
        acc2 = jnp.dot(y1p[0:H, :], t2_ref[0],
                       preferred_element_type=jnp.float32)
        acc2 = acc2 + jnp.dot(y1p[1:H + 1, :], t2_ref[1],
                              preferred_element_type=jnp.float32)
        acc2 = acc2 + jnp.dot(y1p[2:H + 2, :], t2_ref[2],
                              preferred_element_type=jnp.float32)
        y2 = jnp.maximum(acc2 + b2_ref[...], 0.0)               # (H, W*Cout)

        # ---- 2x2 / stride-2 max pool via shifted elementwise maxes ----
        ph = jnp.maximum(y2[0:H - 1, :], y2[1:H, :])            # rows: pair max
        o_ref[...] = jnp.maximum(ph[:, 0:(W - 1) * Cout],       # lanes: w-pair max
                                 ph[:, Cout:W * Cout])

    out_wide = pl.pallas_call(
        kernel,
        out_shape=jax.ShapeDtypeStruct((B, H - 1, (W - 1) * Cout), jnp.float32),
        grid_spec=pltpu.PrefetchScalarGridSpec(
            num_scalar_prefetch=0,
            grid=(B,),
            in_specs=[
                pl.BlockSpec((None, H + 2, W * Cin), lambda b: (b, 0, 0)),
                pl.BlockSpec((3, W * Cin, W * Chid), lambda b: (0, 0, 0)),
                pl.BlockSpec((1, W * Chid), lambda b: (0, 0)),
                pl.BlockSpec((3, W * Chid, W * Cout), lambda b: (0, 0, 0)),
                pl.BlockSpec((1, W * Cout), lambda b: (0, 0)),
            ],
            out_specs=pl.BlockSpec((None, H - 1, (W - 1) * Cout),
                                   lambda b: (b, 0, 0)),
        ),
        compiler_params=pltpu.CompilerParams(
            dimension_semantics=("parallel",)),
    )(x_pad, t1, b1r, t2, b2r)

    # layout-only: keep even rows / even w-groups (the pooled values), -> NCHW
    out = out_wide[:, 0::2, :]                                   # (B, H//2, (W-1)*Cout)
    out = out.reshape(B, H // 2, W - 1, Cout)[:, :, 0::2, :]     # (B, H//2, W//2, Cout)
    return jnp.transpose(out, (0, 3, 1, 2))                      # (B, Cout, H//2, W//2)


def basic_block_ref(x, w1, b1, w2, b2):
    """Pure-JAX reference (NCHW), mirrors the PyTorch module."""
    dn = lax.conv_dimension_numbers(x.shape, w1.shape, ('NCHW', 'OIHW', 'NCHW'))
    y = lax.conv_general_dilated(x, w1, (1, 1), ((1, 1), (1, 1)),
                                 dimension_numbers=dn)
    y = jnp.maximum(y + b1[None, :, None, None], 0.0)
    dn2 = lax.conv_dimension_numbers(y.shape, w2.shape, ('NCHW', 'OIHW', 'NCHW'))
    y = lax.conv_general_dilated(y, w2, (1, 1), ((1, 1), (1, 1)),
                                 dimension_numbers=dn2)
    y = jnp.maximum(y + b2[None, :, None, None], 0.0)
    y = lax.reduce_window(y, -jnp.inf, lax.max,
                          (1, 1, 2, 2), (1, 1, 2, 2), 'VALID')
    return y


if __name__ == "__main__":
    # BasicBlock(in_channels=4, out_channels=4, hidden_dim=8), input (2, 4, 16, 16)
    B, Cin, H, W = 2, 4, 16, 16
    Chid, Cout = 8, 4

    key = jax.random.PRNGKey(0)
    k1, k2, k3, k4, k5 = jax.random.split(key, 5)
    x = jax.random.normal(k1, (B, Cin, H, W), jnp.float32)
    w1 = jax.random.normal(k2, (Chid, Cin, 3, 3), jnp.float32) * 0.2
    b1 = jax.random.normal(k3, (Chid,), jnp.float32) * 0.1
    w2 = jax.random.normal(k4, (Cout, Chid, 3, 3), jnp.float32) * 0.2
    b2 = jax.random.normal(k5, (Cout,), jnp.float32) * 0.1

    fwd = jax.jit(basic_block_forward)
    out = jax.block_until_ready(fwd(x, w1, b1, w2, b2))

    ref = basic_block_ref(x, w1, b1, w2, b2)
    assert out.shape == ref.shape, (out.shape, ref.shape)
    err = float(jnp.max(jnp.abs(out - ref)))
    if err > 1e-3:
        raise AssertionError(f"mismatch vs reference, max abs err = {err}")
    print("KERNEL_OK")
</pallas_src>

<mosaic_0001>
module attributes {stable_mosaic.version = 11 : i64} {
  func.func @kernel(%arg0: i32, %arg1: memref<1x18x64xf32, #tpu.memory_space<vmem>>, %arg2: memref<3x64x128xf32, #tpu.memory_space<vmem>>, %arg3: memref<1x128xf32, #tpu.memory_space<vmem>>, %arg4: memref<3x128x64xf32, #tpu.memory_space<vmem>>, %arg5: memref<1x64xf32, #tpu.memory_space<vmem>>, %arg6: memref<1x15x60xf32, #tpu.memory_space<vmem>>) attributes {dimension_semantics = [#tpu.dimension_semantics<parallel>], iteration_bounds = array<i64: 2>, scalar_prefetch = 0 : i64, scratch_operands = 0 : i64, tpu.core_type = #tpu.core_type<tc>, window_params = [{transform_indices = @transform_0, window_bounds = array<i64: 1, 18, 64>}, {pipeline_mode = #tpu.pipeline_mode<synchronous>, transform_indices = @transform_1, window_bounds = array<i64: 3, 64, 128>}, {pipeline_mode = #tpu.pipeline_mode<synchronous>, transform_indices = @transform_2, window_bounds = array<i64: 1, 128>}, {pipeline_mode = #tpu.pipeline_mode<synchronous>, transform_indices = @transform_3, window_bounds = array<i64: 3, 128, 64>}, {pipeline_mode = #tpu.pipeline_mode<synchronous>, transform_indices = @transform_4, window_bounds = array<i64: 1, 64>}, {transform_indices = @transform_5, window_bounds = array<i64: 1, 15, 60>}]} {
    %c0 = arith.constant 0 : index
    %c0_0 = arith.constant 0 : index
    %c0_1 = arith.constant 0 : index
    %0 = vector.load %arg1[%c0, %c0_0, %c0_1] : memref<1x18x64xf32, #tpu.memory_space<vmem>>, vector<1x16x64xf32>
    %1 = vector.shape_cast %0 : vector<1x16x64xf32> to vector<16x64xf32>
    %c0_2 = arith.constant 0 : index
    %c0_3 = arith.constant 0 : index
    %c0_4 = arith.constant 0 : index
    %2 = vector.load %arg2[%c0_2, %c0_3, %c0_4] : memref<3x64x128xf32, #tpu.memory_space<vmem>>, vector<1x64x128xf32>
    %3 = vector.shape_cast %2 : vector<1x64x128xf32> to vector<64x128xf32>
    %cst = arith.constant dense<0.000000e+00> : vector<16x128xf32>
    %4 = tpu.matmul %1, %3, %cst {dimension_numbers = #tpu.dot_dimension_numbers<[1], [0], [0], [1], [0, 0, 1, 1], [], []>} : vector<16x64xf32>, vector<64x128xf32>, vector<16x128xf32> -> vector<16x128xf32>
    %c0_5 = arith.constant 0 : index
    %c1 = arith.constant 1 : index
    %c0_6 = arith.constant 0 : index
    %5 = vector.load %arg1[%c0_5, %c1, %c0_6] : memref<1x18x64xf32, #tpu.memory_space<vmem>>, vector<1x16x64xf32>
    %6 = vector.shape_cast %5 : vector<1x16x64xf32> to vector<16x64xf32>
    %c1_7 = arith.constant 1 : index
    %c0_8 = arith.constant 0 : index
    %c0_9 = arith.constant 0 : index
    %7 = vector.load %arg2[%c1_7, %c0_8, %c0_9] : memref<3x64x128xf32, #tpu.memory_space<vmem>>, vector<1x64x128xf32>
    %8 = vector.shape_cast %7 : vector<1x64x128xf32> to vector<64x128xf32>
    %cst_10 = arith.constant dense<0.000000e+00> : vector<16x128xf32>
    %9 = tpu.matmul %6, %8, %cst_10 {dimension_numbers = #tpu.dot_dimension_numbers<[1], [0], [0], [1], [0, 0, 1, 1], [], []>} : vector<16x64xf32>, vector<64x128xf32>, vector<16x128xf32> -> vector<16x128xf32>
    %10 = arith.addf %4, %9 : vector<16x128xf32>
    %c0_11 = arith.constant 0 : index
    %c2 = arith.constant 2 : index
    %c0_12 = arith.constant 0 : index
    %11 = vector.load %arg1[%c0_11, %c2, %c0_12] : memref<1x18x64xf32, #tpu.memory_space<vmem>>, vector<1x16x64xf32>
    %12 = vector.shape_cast %11 : vector<1x16x64xf32> to vector<16x64xf32>
    %c2_13 = arith.constant 2 : index
    %c0_14 = arith.constant 0 : index
    %c0_15 = arith.constant 0 : index
    %13 = vector.load %arg2[%c2_13, %c0_14, %c0_15] : memref<3x64x128xf32, #tpu.memory_space<vmem>>, vector<1x64x128xf32>
    %14 = vector.shape_cast %13 : vector<1x64x128xf32> to vector<64x128xf32>
    %cst_16 = arith.constant dense<0.000000e+00> : vector<16x128xf32>
    %15 = tpu.matmul %12, %14, %cst_16 {dimension_numbers = #tpu.dot_dimension_numbers<[1], [0], [0], [1], [0, 0, 1, 1], [], []>} : vector<16x64xf32>, vector<64x128xf32>, vector<16x128xf32> -> vector<16x128xf32>
    %16 = arith.addf %10, %15 : vector<16x128xf32>
    %c0_17 = arith.constant 0 : index
    %c0_18 = arith.constant 0 : index
    %17 = vector.load %arg3[%c0_17, %c0_18] : memref<1x128xf32, #tpu.memory_space<vmem>>, vector<1x128xf32>
    %18 = vector.broadcast %17 : vector<1x128xf32> to vector<16x128xf32>
    %19 = arith.addf %16, %18 : vector<16x128xf32>
    %cst_19 = arith.constant 0.000000e+00 : f32
    %20 = vector.broadcast %cst_19 : f32 to vector<16x128xf32>
    %21 = arith.maximumf %19, %20 : vector<16x128xf32>
    %cst_20 = arith.constant 0.000000e+00 : f32
    %22 = vector.broadcast %cst_20 : f32 to vector<1x128xf32>
    %23 = tpu.concatenate %22, %21, %22 in 0 : vector<1x128xf32>, vector<16x128xf32>, vector<1x128xf32> -> vector<18x128xf32>
    %24 = vector.extract_strided_slice %23 {offsets = [0, 0], sizes = [16, 128], strides = [1, 1]} : vector<18x128xf32> to vector<16x128xf32>
    %c0_21 = arith.constant 0 : index
    %c0_22 = arith.constant 0 : index
    %c0_23 = arith.constant 0 : index
    %25 = vector.load %arg4[%c0_21, %c0_22, %c0_23] : memref<3x128x64xf32, #tpu.memory_space<vmem>>, vector<1x128x64xf32>
    %26 = vector.shape_cast %25 : vector<1x128x64xf32> to vector<128x64xf32>
    %cst_24 = arith.constant dense<0.000000e+00> : vector<16x64xf32>
    %27 = tpu.matmul %24, %26, %cst_24 {dimension_numbers = #tpu.dot_dimension_numbers<[1], [0], [0], [1], [0, 0, 1, 1], [], []>} : vector<16x128xf32>, vector<128x64xf32>, vector<16x64xf32> -> vector<16x64xf32>
    %28 = vector.extract_strided_slice %23 {offsets = [1, 0], sizes = [16, 128], strides = [1, 1]} : vector<18x128xf32> to vector<16x128xf32>
    %c1_25 = arith.constant 1 : index
    %c0_26 = arith.constant 0 : index
    %c0_27 = arith.constant 0 : index
    %29 = vector.load %arg4[%c1_25, %c0_26, %c0_27] : memref<3x128x64xf32, #tpu.memory_space<vmem>>, vector<1x128x64xf32>
    %30 = vector.shape_cast %29 : vector<1x128x64xf32> to vector<128x64xf32>
    %cst_28 = arith.constant dense<0.000000e+00> : vector<16x64xf32>
    %31 = tpu.matmul %28, %30, %cst_28 {dimension_numbers = #tpu.dot_dimension_numbers<[1], [0], [0], [1], [0, 0, 1, 1], [], []>} : vector<16x128xf32>, vector<128x64xf32>, vector<16x64xf32> -> vector<16x64xf32>
    %32 = arith.addf %27, %31 : vector<16x64xf32>
    %33 = vector.extract_strided_slice %23 {offsets = [2, 0], sizes = [16, 128], strides = [1, 1]} : vector<18x128xf32> to vector<16x128xf32>
    %c2_29 = arith.constant 2 : index
    %c0_30 = arith.constant 0 : index
    %c0_31 = arith.constant 0 : index
    %34 = vector.load %arg4[%c2_29, %c0_30, %c0_31] : memref<3x128x64xf32, #tpu.memory_space<vmem>>, vector<1x128x64xf32>
    %35 = vector.shape_cast %34 : vector<1x128x64xf32> to vector<128x64xf32>
    %cst_32 = arith.constant dense<0.000000e+00> : vector<16x64xf32>
    %36 = tpu.matmul %33, %35, %cst_32 {dimension_numbers = #tpu.dot_dimension_numbers<[1], [0], [0], [1], [0, 0, 1, 1], [], []>} : vector<16x128xf32>, vector<128x64xf32>, vector<16x64xf32> -> vector<16x64xf32>
    %37 = arith.addf %32, %36 : vector<16x64xf32>
    %c0_33 = arith.constant 0 : index
    %c0_34 = arith.constant 0 : index
    %38 = vector.load %arg5[%c0_33, %c0_34] : memref<1x64xf32, #tpu.memory_space<vmem>>, vector<1x64xf32>
    %39 = vector.broadcast %38 : vector<1x64xf32> to vector<16x64xf32>
    %40 = arith.addf %37, %39 : vector<16x64xf32>
    %cst_35 = arith.constant 0.000000e+00 : f32
    %41 = vector.broadcast %cst_35 : f32 to vector<16x64xf32>
    %42 = arith.maximumf %40, %41 : vector<16x64xf32>
    %43 = vector.extract_strided_slice %42 {offsets = [0, 0], sizes = [15, 64], strides = [1, 1]} : vector<16x64xf32> to vector<15x64xf32>
    %44 = vector.extract_strided_slice %42 {offsets = [1, 0], sizes = [15, 64], strides = [1, 1]} : vector<16x64xf32> to vector<15x64xf32>
    %45 = arith.maximumf %43, %44 : vector<15x64xf32>
    %46 = vector.extract_strided_slice %45 {offsets = [0, 0], sizes = [15, 60], strides = [1, 1]} : vector<15x64xf32> to vector<15x60xf32>
    %47 = vector.extract_strided_slice %45 {offsets = [0, 4], sizes = [15, 60], strides = [1, 1]} : vector<15x64xf32> to vector<15x60xf32>
    %48 = arith.maximumf %46, %47 : vector<15x60xf32>
    %c0_36 = arith.constant 0 : index
    %c0_37 = arith.constant 0 : index
    %c0_38 = arith.constant 0 : index
    %49 = vector.load %arg6[%c0_36, %c0_37, %c0_38] : memref<1x15x60xf32, #tpu.memory_space<vmem>>, vector<1x15x60xf32>
    %50 = vector.shape_cast %49 : vector<1x15x60xf32> to vector<15x60xf32>
    %51 = vector.shape_cast %48 : vector<15x60xf32> to vector<1x15x60xf32>
    tpu.vector_store %arg6[%c0_36, %c0_37, %c0_38], %51 {strides = array<i32>} : memref<1x15x60xf32, #tpu.memory_space<vmem>>, vector<1x15x60xf32>,
    return
  }
  func.func @transform_0(%arg0: i32) -> (i32, i32, i32) {
    %c0_i32 = arith.constant 0 : i32
    %c0_i32_0 = arith.constant 0 : i32
    %c0_i32_1 = arith.constant 0 : i32
    return %arg0, %c0_i32, %c0_i32_0 : i32, i32, i32
  }
  func.func @transform_1(%arg0: i32) -> (i32, i32, i32) {
    %c0_i32 = arith.constant 0 : i32
    %c0_i32_0 = arith.constant 0 : i32
    %c0_i32_1 = arith.constant 0 : i32
    %c0_i32_2 = arith.constant 0 : i32
    return %c0_i32, %c0_i32_0, %c0_i32_1 : i32, i32, i32
  }
  func.func @transform_2(%arg0: i32) -> (i32, i32) {
    %c0_i32 = arith.constant 0 : i32
    %c0_i32_0 = arith.constant 0 : i32
    %c0_i32_1 = arith.constant 0 : i32
    return %c0_i32, %c0_i32_0 : i32, i32
  }
  func.func @transform_3(%arg0: i32) -> (i32, i32, i32) {
    %c0_i32 = arith.constant 0 : i32
    %c0_i32_0 = arith.constant 0 : i32
    %c0_i32_1 = arith.constant 0 : i32
    %c0_i32_2 = arith.constant 0 : i32
    return %c0_i32, %c0_i32_0, %c0_i32_1 : i32, i32, i32
  }
  func.func @transform_4(%arg0: i32) -> (i32, i32) {
    %c0_i32 = arith.constant 0 : i32
    %c0_i32_0 = arith.constant 0 : i32
    %c0_i32_1 = arith.constant 0 : i32
    return %c0_i32, %c0_i32_0 : i32, i32
  }
  func.func @transform_5(%arg0: i32) -> (i32, i32, i32) {
    %c0_i32 = arith.constant 0 : i32
    %c0_i32_0 = arith.constant 0 : i32
    %c0_i32_1 = arith.constant 0 : i32
    return %arg0, %c0_i32, %c0_i32_0 : i32, i32, i32
  }
}

</mosaic_0001>

<llo_original>
// kernel: tile.13
$region0: #{tile.13}
  #allocation0 [shape = 's32[1]{0}', space=sflag, size = 0x4, scoped, tag = 'scoped memory for tile.13']
  %s0 = inlined_call_operand.vmem [shape: f32[8], index: 0, kind: input, shape index: {}]
  %s1 = inlined_call_operand.vmem [shape: f32[16,8], index: 1, kind: output, shape index: {}]
  // Predicated region
  $region2: #{tile.13} parent=0 // pred_check
    _
  $region3: #{tile.13} parent=0 // pred_check_branch
    %3 = sbr.rel (0) target = $region5
  $region4: #{tile.13} parent=0 // pred_region
    _
  $region5: #{tile.13} parent=0 // pred_fallthru
    _
  %v4 = vld [vmem:[%s0] ss:$0 sm:$0xff]
  %5 = vst [vmem:[%s1] sm:$0xff] %v4
  %s6 = scalar_lea.vmem %s1, 8
  %7 = vst [vmem:[%s6] sm:$0xff] %v4

// kernel: tile.14
$region0: #{tile.14}
  %s0 = inlined_call_operand.vmem [shape: f32[16,8], index: 0, kind: input, shape index: {}]
  %s1 = inlined_call_operand.vmem [shape: f32[1,128], index: 1, kind: output, shape index: {}]
  $region1: #{tile.14} parent=0
    #allocation0 [shape = 'u8[4096]{0}', space=vmem, size = 0x1000, scoped, tag = 'scoped mem for output reshape']
    %v2 = vld [vmem:[%s0] sm:$0x1]
    %vm3 = vcmask 64512
    %4 = vst.msk [vmem:[#allocation0] sm:$0x1] %vm3, %v2
    %s5 = scalar_lea.vmem %s0, 15
    %v6 = vld [vmem:[%s5] sm:$0x1]
    %7 = vrot.lane.b32.xlu0 %v6, 120
    %v8 = vpop.permute.xlu0 %7
    %vm9 = vcmask 1048512
    %10 = vst.msk [vmem:[#allocation0] sm:$0x1] %vm9, %v8
    %s11 = scalar_lea.vmem %s0, 14
    %v12 = vld [vmem:[%s11] sm:$0x1]
    %13 = vrot.lane.b32.xlu0 %v12, 112
    %v14 = vpop.permute.xlu0 %13
    %vm15 = vcmask 982912
    %16 = vst.msk [vmem:[#allocation0] sm:$0x1] %vm15, %v14
    %s17 = scalar_lea.vmem %s0, 13
    %v18 = vld [vmem:[%s17] sm:$0x1]
    %19 = vrot.lane.b32.xlu0 %v18, 104
    %v20 = vpop.permute.xlu0 %19
    %vm21 = vcmask 917312
    %22 = vst.msk [vmem:[#allocation0] sm:$0x1] %vm21, %v20
    %s23 = scalar_lea.vmem %s0, 12
    %v24 = vld [vmem:[%s23] sm:$0x1]
    %25 = vrot.lane.b32.xlu0 %v24, 96
    %v26 = vpop.permute.xlu0 %25
    %vm27 = vcmask 851712
    %28 = vst.msk [vmem:[#allocation0] sm:$0x1] %vm27, %v26
    %s29 = scalar_lea.vmem %s0, 11
    %v30 = vld [vmem:[%s29] sm:$0x1]
    %31 = vrot.lane.b32.xlu0 %v30, 88
    %v32 = vpop.permute.xlu0 %31
    %vm33 = vcmask 786112
    %34 = vst.msk [vmem:[#allocation0] sm:$0x1] %vm33, %v32
    %s35 = scalar_lea.vmem %s0, 10
    %v36 = vld [vmem:[%s35] sm:$0x1]
    %37 = vrot.lane.b32.xlu0 %v36, 80
    %v38 = vpop.permute.xlu0 %37
    %vm39 = vcmask 720512
    %40 = vst.msk [vmem:[#allocation0] sm:$0x1] %vm39, %v38
    %s41 = scalar_lea.vmem %s0, 9
    %v42 = vld [vmem:[%s41] sm:$0x1]
    %43 = vrot.lane.b32.xlu0 %v42, 72
    %v44 = vpop.permute.xlu0 %43
    %vm45 = vcmask 654912
    %46 = vst.msk [vmem:[#allocation0] sm:$0x1] %vm45, %v44
    %s47 = scalar_lea.vmem %s0, 8
    %v48 = vld [vmem:[%s47] sm:$0x1]
    %49 = vrot.lane.b32.xlu0 %v48, 64
    %v50 = vpop.permute.xlu0 %49
    %vm51 = vcmask 589312
    %52 = vst.msk [vmem:[#allocation0] sm:$0x1] %vm51, %v50
    %s53 = scalar_lea.vmem %s0, 7
    %v54 = vld [vmem:[%s53] sm:$0x1]
    %55 = vrot.lane.b32.xlu0 %v54, 56
    %v56 = vpop.permute.xlu0 %55
    %vm57 = vcmask 523712
    %58 = vst.msk [vmem:[#allocation0] sm:$0x1] %vm57, %v56
    %s59 = scalar_lea.vmem %s0, 6
    %v60 = vld [vmem:[%s59] sm:$0x1]
    %61 = vrot.lane.b32.xlu0 %v60, 48
    %v62 = vpop.permute.xlu0 %61
    %vm63 = vcmask 458112
    %64 = vst.msk [vmem:[#allocation0] sm:$0x1] %vm63, %v62
    %s65 = scalar_lea.vmem %s0, 5
    %v66 = vld [vmem:[%s65] sm:$0x1]
    %67 = vrot.lane.b32.xlu0 %v66, 40
    %v68 = vpop.permute.xlu0 %67
    %vm69 = vcmask 392512
    %70 = vst.msk [vmem:[#allocation0] sm:$0x1] %vm69, %v68
    %s71 = scalar_lea.vmem %s0, 4
    %v72 = vld [vmem:[%s71] sm:$0x1]
    %73 = vrot.lane.b32.xlu0 %v72, 32
    %v74 = vpop.permute.xlu0 %73
    %vm75 = vcmask 326912
    %76 = vst.msk [vmem:[#allocation0] sm:$0x1] %vm75, %v74
    %s77 = scalar_lea.vmem %s0, 3
    %v78 = vld [vmem:[%s77] sm:$0x1]
    %79 = vrot.lane.b32.xlu0 %v78, 24
    %v80 = vpop.permute.xlu0 %79
    %vm81 = vcmask 261312
    %82 = vst.msk [vmem:[#allocation0] sm:$0x1] %vm81, %v80
    %s83 = scalar_lea.vmem %s0, 2
    %v84 = vld [vmem:[%s83] sm:$0x1]
    %85 = vrot.lane.b32.xlu0 %v84, 16
    %v86 = vpop.permute.xlu0 %85
    %vm87 = vcmask 195712
    %88 = vst.msk [vmem:[#allocation0] sm:$0x1] %vm87, %v86
    %s89 = scalar_lea.vmem %s0, 1
    %v90 = vld [vmem:[%s89] sm:$0x1]
    %91 = vrot.lane.b32.xlu0 %v90, 8
    %v92 = vpop.permute.xlu0 %91
    %vm93 = vcmask 130112
    %94 = vst.msk [vmem:[#allocation0] sm:$0x1] %vm93, %v92
    %s96 = ssub.s32 2, 1
    %v97 = vld [vmem:[#allocation0] sm:%s96]
    %s99 = ssub.s32 2, 1
    %100 = vst [vmem:[%s1] sm:%s99] %v97

// kernel: tile.18
$region0: #{tile.18}
  #allocation0 [shape = 's32[1]{0}', space=sflag, size = 0x4, scoped, tag = 'scoped memory for tile.18']
  %s0 = inlined_call_operand.vmem [shape: f32[4], index: 0, kind: input, shape index: {}]
  %s1 = inlined_call_operand.vmem [shape: f32[16,4], index: 1, kind: output, shape index: {}]
  // Predicated region
  $region2: #{tile.18} parent=0 // pred_check
    _
  $region3: #{tile.18} parent=0 // pred_check_branch
    %3 = sbr.rel (0) target = $region5
  $region4: #{tile.18} parent=0 // pred_region
    _
  $region5: #{tile.18} parent=0 // pred_fallthru
    _
  %v4 = vld [vmem:[%s0] ss:$0 sm:$0xff]
  %5 = vst [vmem:[%s1] sm:$0xff] %v4
  %s6 = scalar_lea.vmem %s1, 8
  %7 = vst [vmem:[%s6] sm:$0xff] %v4

// kernel: tile.19
$region0: #{tile.19}
  %s0 = inlined_call_operand.vmem [shape: f32[16,4], index: 0, kind: input, shape index: {}]
  %s1 = inlined_call_operand.vmem [shape: f32[1,64], index: 1, kind: output, shape index: {}]
  $region1: #{tile.19} parent=0
    #allocation0 [shape = 'u8[4096]{0}', space=vmem, size = 0x1000, scoped, tag = 'scoped mem for output reshape']
    %v2 = vld [vmem:[%s0] sm:$0x1]
    %vm3 = vcmask 31744
    %4 = vst.msk [vmem:[#allocation0] sm:$0x1] %vm3, %v2
    %s5 = scalar_lea.vmem %s0, 15
    %v6 = vld [vmem:[%s5] sm:$0x1]
    %7 = vrot.lane.b32.xlu0 %v6, 60
    %v8 = vpop.permute.xlu0 %7
    %vm9 = vcmask 523744
    %10 = vst.msk [vmem:[#allocation0] sm:$0x1] %vm9, %v8
    %s11 = scalar_lea.vmem %s0, 14
    %v12 = vld [vmem:[%s11] sm:$0x1]
    %13 = vrot.lane.b32.xlu0 %v12, 56
    %v14 = vpop.permute.xlu0 %13
    %vm15 = vcmask 490944
    %16 = vst.msk [vmem:[#allocation0] sm:$0x1] %vm15, %v14
    %s17 = scalar_lea.vmem %s0, 13
    %v18 = vld [vmem:[%s17] sm:$0x1]
    %19 = vrot.lane.b32.xlu0 %v18, 52
    %v20 = vpop.permute.xlu0 %19
    %vm21 = vcmask 458144
    %22 = vst.msk [vmem:[#allocation0] sm:$0x1] %vm21, %v20
    %s23 = scalar_lea.vmem %s0, 12
    %v24 = vld [vmem:[%s23] sm:$0x1]
    %25 = vrot.lane.b32.xlu0 %v24, 48
    %v26 = vpop.permute.xlu0 %25
    %vm27 = vcmask 425344
    %28 = vst.msk [vmem:[#allocation0] sm:$0x1] %vm27, %v26
    %s29 = scalar_lea.vmem %s0, 11
    %v30 = vld [vmem:[%s29] sm:$0x1]
    %31 = vrot.lane.b32.xlu0 %v30, 44
    %v32 = vpop.permute.xlu0 %31
    %vm33 = vcmask 392544
    %34 = vst.msk [vmem:[#allocation0] sm:$0x1] %vm33, %v32
    %s35 = scalar_lea.vmem %s0, 10
    %v36 = vld [vmem:[%s35] sm:$0x1]
    %37 = vrot.lane.b32.xlu0 %v36, 40
    %v38 = vpop.permute.xlu0 %37
    %vm39 = vcmask 359744
    %40 = vst.msk [vmem:[#allocation0] sm:$0x1] %vm39, %v38
    %s41 = scalar_lea.vmem %s0, 9
    %v42 = vld [vmem:[%s41] sm:$0x1]
    %43 = vrot.lane.b32.xlu0 %v42, 36
    %v44 = vpop.permute.xlu0 %43
    %vm45 = vcmask 326944
    %46 = vst.msk [vmem:[#allocation0] sm:$0x1] %vm45, %v44
    %s47 = scalar_lea.vmem %s0, 8
    %v48 = vld [vmem:[%s47] sm:$0x1]
    %49 = vrot.lane.b32.xlu0 %v48, 32
    %v50 = vpop.permute.xlu0 %49
    %vm51 = vcmask 294144
    %52 = vst.msk [vmem:[#allocation0] sm:$0x1] %vm51, %v50
    %s53 = scalar_lea.vmem %s0, 7
    %v54 = vld [vmem:[%s53] sm:$0x1]
    %55 = vrot.lane.b32.xlu0 %v54, 28
    %v56 = vpop.permute.xlu0 %55
    %vm57 = vcmask 261344
    %58 = vst.msk [vmem:[#allocation0] sm:$0x1] %vm57, %v56
    %s59 = scalar_lea.vmem %s0, 6
    %v60 = vld [vmem:[%s59] sm:$0x1]
    %61 = vrot.lane.b32.xlu0 %v60, 24
    %v62 = vpop.permute.xlu0 %61
    %vm63 = vcmask 228544
    %64 = vst.msk [vmem:[#allocation0] sm:$0x1] %vm63, %v62
    %s65 = scalar_lea.vmem %s0, 5
    %v66 = vld [vmem:[%s65] sm:$0x1]
    %67 = vrot.lane.b32.xlu0 %v66, 20
    %v68 = vpop.permute.xlu0 %67
    %vm69 = vcmask 195744
    %70 = vst.msk [vmem:[#allocation0] sm:$0x1] %vm69, %v68
    %s71 = scalar_lea.vmem %s0, 4
    %v72 = vld [vmem:[%s71] sm:$0x1]
    %73 = vrot.lane.b32.xlu0 %v72, 16
    %v74 = vpop.permute.xlu0 %73
    %vm75 = vcmask 162944
    %76 = vst.msk [vmem:[#allocation0] sm:$0x1] %vm75, %v74
    %s77 = scalar_lea.vmem %s0, 3
    %v78 = vld [vmem:[%s77] sm:$0x1]
    %79 = vrot.lane.b32.xlu0 %v78, 12
    %v80 = vpop.permute.xlu0 %79
    %vm81 = vcmask 130144
    %82 = vst.msk [vmem:[#allocation0] sm:$0x1] %vm81, %v80
    %s83 = scalar_lea.vmem %s0, 2
    %v84 = vld [vmem:[%s83] sm:$0x1]
    %85 = vrot.lane.b32.xlu0 %v84, 8
    %v86 = vpop.permute.xlu0 %85
    %vm87 = vcmask 97344
    %88 = vst.msk [vmem:[#allocation0] sm:$0x1] %vm87, %v86
    %s89 = scalar_lea.vmem %s0, 1
    %v90 = vld [vmem:[%s89] sm:$0x1]
    %91 = vrot.lane.b32.xlu0 %v90, 4
    %v92 = vpop.permute.xlu0 %91
    %vm93 = vcmask 64544
    %94 = vst.msk [vmem:[#allocation0] sm:$0x1] %vm93, %v92
    %s96 = ssub.s32 2, 1
    %v97 = vld [vmem:[#allocation0] sm:%s96]
    %s99 = ssub.s32 2, 1
    %100 = vst [vmem:[%s1] sm:%s99] %v97

// kernel: basic_block_forward.1
$region0: #{basic_block_forward.1}
  #allocation0 [shape = 'u32[]', space=smem, size = 0x4, offset = 0x4, fixed_abs, tag = 'smem constant byte address 0x4 - core index']
  #allocation1 [shape = 'u32[72,128]{1,0:T(1,128)}', space=vmem, size = 0x9000, scoped, tag = 'internal scratch']
  %s0 = inlined_call_operand.vmem [shape: f32[2,18,64], index: 0, kind: input, shape index: {}]
  %s1 = inlined_call_operand.vmem [shape: f32[3,64,128], index: 1, kind: input, shape index: {}]
  %s2 = inlined_call_operand.vmem [shape: f32[1,128], index: 2, kind: input, shape index: {}]
  %s3 = inlined_call_operand.vmem [shape: f32[3,128,64], index: 3, kind: input, shape index: {}]
  %s4 = inlined_call_operand.vmem [shape: f32[1,64], index: 4, kind: input, shape index: {}]
  %s5 = inlined_call_operand.vmem [shape: f32[2,15,60], index: 5, kind: output, shape index: {}]
  %s6 = sld [smem:[#allocation0]]
  $region53: #{basic_block_forward.1} parent=0
    _
  %s8 = ssub.s32 1, %s6
  %s9 = scalar_select 0, %s8, %s6
  loop: start=0, step=1, limit=4
  $region2: #{basic_block_forward.1} parent=0 // loop_pre_header
    _
  $region3: #{basic_block_forward.1} parent=0 // loop_header
    %s11 = sphi 0, %s15
    %p12 = scmp.ge.s32.totalorder %s11, 4
    %s21 = sphi 0, %s23
    %s24 = sphi 0, %s21
    %s25 = sphi 0, %s24
    %s41 = sphi 0, %s25
    %s45 = sphi 0, %s45
    %s47 = sphi 0, %s45
    %s48 = sphi 0, %s47
    %s62 = sphi 0, %s48
    %s66 = sphi 0, %s66
    %s68 = sphi 0, %s66
    %s69 = sphi 0, %s68
    %s83 = sphi 0, %s69
    %s87 = sphi 0, %s87
    %s89 = sphi 0, %s87
    %s90 = sphi 0, %s89
    %s104 = sphi 0, %s90
    %s108 = sphi 0, %s108
    %s110 = sphi 0, %s108
    %s111 = sphi 0, %s110
    %s125 = sphi 0, %s111
    %s131 = sphi 0, %s133
    %s134 = sphi 0, %s131
    %s135 = sphi 0, %s134
    %s151 = sphi 0, %s135
  $region4: #{basic_block_forward.1} parent=0 // loop_header_branch
    %14 = sbr.rel (%p12) target = $region8
  $region5: #{basic_block_forward.1} parent=0 // loop_body
    %s16 = ssub.s32 %s11, 1
    %s17 = ssub.s32 %s11, 2
    %s18 = sadd.s32 %s11, 1
    %s19 = ssub.s32 %s11, %s18
    %p20 = scmp.eq.s32.totalorder %s19, 0
    %s22 = sadd.s32 %s21, 1
    %s23 = scalar_select %p20, %s21, %s22
    %p26 = pneg %p20
    %p27 = scmp.eq.s32.totalorder %s11, 1
    %p28 = por %p26, %p27
    %p29 = scmp.ne.s32.totalorder %s21, %s24
    %p30 = scmp.eq.s32.totalorder %s11, 0
    %p31 = por %p29, %p30
    %p32 = scmp.ne.s32.totalorder %s21, %s24
    %p33 = scmp.eq.s32.totalorder %s16, 1
    %p34 = por %p32, %p33
    %p35 = scmp.ne.s32.totalorder %s24, %s25
    %p36 = scmp.eq.s32.totalorder %s16, 0
    %p37 = por %p35, %p36
    %p38 = scmp.ne.s32.totalorder %s24, %s25
    %p39 = scmp.eq.s32.totalorder %s17, 1
    %p40 = por %p38, %p39
    %p42 = scmp.ne.s32.totalorder %s25, %s41
    %p43 = scmp.eq.s32.totalorder %s17, 0
    %p44 = por %p42, %p43
    %s46 = sadd.s32 %s45, 1
    %p49 = scmp.eq.s32.totalorder %s11, 1
    %p50 = scmp.ne.s32.totalorder %s45, %s47
    %p51 = scmp.eq.s32.totalorder %s11, 0
    %p52 = por %p50, %p51
    %p53 = scmp.ne.s32.totalorder %s45, %s47
    %p54 = scmp.eq.s32.totalorder %s16, 1
    %p55 = por %p53, %p54
    %p56 = scmp.ne.s32.totalorder %s47, %s48
    %p57 = scmp.eq.s32.totalorder %s16, 0
    %p58 = por %p56, %p57
    %p59 = scmp.ne.s32.totalorder %s47, %s48
    %p60 = scmp.eq.s32.totalorder %s17, 1
    %p61 = por %p59, %p60
    %p63 = scmp.ne.s32.totalorder %s48, %s62
    %p64 = scmp.eq.s32.totalorder %s17, 0
    %p65 = por %p63, %p64
    %s67 = sadd.s32 %s66, 1
    %p70 = scmp.eq.s32.totalorder %s11, 1
    %p71 = scmp.ne.s32.totalorder %s66, %s68
    %p72 = scmp.eq.s32.totalorder %s11, 0
    %p73 = por %p71, %p72
    %p74 = scmp.ne.s32.totalorder %s66, %s68
    %p75 = scmp.eq.s32.totalorder %s16, 1
    %p76 = por %p74, %p75
    %p77 = scmp.ne.s32.totalorder %s68, %s69
    %p78 = scmp.eq.s32.totalorder %s16, 0
    %p79 = por %p77, %p78
    %p80 = scmp.ne.s32.totalorder %s68, %s69
    %p81 = scmp.eq.s32.totalorder %s17, 1
    %p82 = por %p80, %p81
    %p84 = scmp.ne.s32.totalorder %s69, %s83
    %p85 = scmp.eq.s32.totalorder %s17, 0
    %p86 = por %p84, %p85
    %s88 = sadd.s32 %s87, 1
    %p91 = scmp.eq.s32.totalorder %s11, 1
    %p92 = scmp.ne.s32.totalorder %s87, %s89
    %p93 = scmp.eq.s32.totalorder %s11, 0
    %p94 = por %p92, %p93
    %p95 = scmp.ne.s32.totalorder %s87, %s89
    %p96 = scmp.eq.s32.totalorder %s16, 1
    %p97 = por %p95, %p96
    %p98 = scmp.ne.s32.totalorder %s89, %s90
    %p99 = scmp.eq.s32.totalorder %s16, 0
    %p100 = por %p98, %p99
    %p101 = scmp.ne.s32.totalorder %s89, %s90
    %p102 = scmp.eq.s32.totalorder %s17, 1
    %p103 = por %p101, %p102
    %p105 = scmp.ne.s32.totalorder %s90, %s104
    %p106 = scmp.eq.s32.totalorder %s17, 0
    %p107 = por %p105, %p106
    %s109 = sadd.s32 %s108, 1
    %p112 = scmp.eq.s32.totalorder %s11, 1
    %p113 = scmp.ne.s32.totalorder %s108, %s110
    %p114 = scmp.eq.s32.totalorder %s11, 0
    %p115 = por %p113, %p114
    %p116 = scmp.ne.s32.totalorder %s108, %s110
    %p117 = scmp.eq.s32.totalorder %s16, 1
    %p118 = por %p116, %p117
    %p119 = scmp.ne.s32.totalorder %s110, %s111
    %p120 = scmp.eq.s32.totalorder %s16, 0
    %p121 = por %p119, %p120
    %p122 = scmp.ne.s32.totalorder %s110, %s111
    %p123 = scmp.eq.s32.totalorder %s17, 1
    %p124 = por %p122, %p123
    %p126 = scmp.ne.s32.totalorder %s111, %s125
    %p127 = scmp.eq.s32.totalorder %s17, 0
    %p128 = por %p126, %p127
    %s129 = ssub.s32 %s11, %s18
    %p130 = scmp.eq.s32.totalorder %s129, 0
    %s132 = sadd.s32 %s131, 1
    %s133 = scalar_select %p130, %s131, %s132
    %p136 = pneg %p130
    %p137 = scmp.eq.s32.totalorder %s11, 1
    %p138 = por %p136, %p137
    %p139 = scmp.ne.s32.totalorder %s131, %s134
    %p140 = scmp.eq.s32.totalorder %s11, 0
    %p141 = por %p139, %p140
    %p142 = scmp.ne.s32.totalorder %s131, %s134
    %p143 = scmp.eq.s32.totalorder %s16, 1
    %p144 = por %p142, %p143
    %p145 = scmp.ne.s32.totalorder %s134, %s135
    %p146 = scmp.eq.s32.totalorder %s16, 0
    %p147 = por %p145, %p146
    %p148 = scmp.ne.s32.totalorder %s134, %s135
    %p149 = scmp.eq.s32.totalorder %s17, 1
    %p150 = por %p148, %p149
    %p152 = scmp.ne.s32.totalorder %s135, %s151
    %p153 = scmp.eq.s32.totalorder %s17, 0
    %p154 = por %p152, %p153
    %p155 = scmp.le.s32.totalorder 1, %s11
    %p156 = scmp.lt.s32.totalorder %s11, 3
    %p157 = pnand %p155, %p156
    %p158 = pneg %p157
    // Predicated region
    $region9: #{basic_block_forward.1} parent=5 // pred_check
      _
    $region10: #{basic_block_forward.1} parent=5 // pred_check_branch
      %160 = sbr.rel (%p157) target = $region12
    $region11: #{basic_block_forward.1} parent=5 // pred_region
      %s161 = ssub.s32 %s11, 1
      // Predicated region
      $region13: #{basic_block_forward.1} parent=11 // pred_check
        %p162 = pneg %p58
      $region14: #{basic_block_forward.1} parent=11 // pred_check_branch
        %164 = sbr.rel (%p162) target = $region16
      $region15: #{basic_block_forward.1} parent=11 // pred_region
        _
      $region16: #{basic_block_forward.1} parent=11 // pred_fallthru
        _
      // Predicated region
      $region17: #{basic_block_forward.1} parent=11 // pred_check
        %p165 = pneg %p79
      $region18: #{basic_block_forward.1} parent=11 // pred_check_branch
        %167 = sbr.rel (%p165) target = $region20
      $region19: #{basic_block_forward.1} parent=11 // pred_region
        _
      $region20: #{basic_block_forward.1} parent=11 // pred_fallthru
        _
      // Predicated region
      $region21: #{basic_block_forward.1} parent=11 // pred_check
        %p168 = pneg %p100
      $region22: #{basic_block_forward.1} parent=11 // pred_check_branch
        %170 = sbr.rel (%p168) target = $region24
      $region23: #{basic_block_forward.1} parent=11 // pred_region
        _
      $region24: #{basic_block_forward.1} parent=11 // pred_fallthru
        _
      // Predicated region
      $region25: #{basic_block_forward.1} parent=11 // pred_check
        %p171 = pneg %p121
      $region26: #{basic_block_forward.1} parent=11 // pred_check_branch
        %173 = sbr.rel (%p171) target = $region28
      $region27: #{basic_block_forward.1} parent=11 // pred_region
        _
      $region28: #{basic_block_forward.1} parent=11 // pred_fallthru
        _
    $region12: #{basic_block_forward.1} parent=5 // pred_fallthru
      _
    %p174 = scmp.lt.s32.totalorder %s11, 2
    // Predicated region
    $region29: #{basic_block_forward.1} parent=5 // pred_check
      %p175 = pneg %p174
    $region30: #{basic_block_forward.1} parent=5 // pred_check_branch
      %177 = sbr.rel (%p175) target = $region32
    $region31: #{basic_block_forward.1} parent=5 // pred_region
      // Predicated region
      $region33: #{basic_block_forward.1} parent=31 // pred_check
        %p178 = pneg %p31
      $region34: #{basic_block_forward.1} parent=31 // pred_check_branch
        %180 = sbr.rel (%p178) target = $region36
      $region35: #{basic_block_forward.1} parent=31 // pred_region
        %p181 = scmp.lt.s32.totalorder %s11, 1
        %s182 = scalar_select %p181, %s11, 1
        %s183 = smul.addr %s182, 3
        %s184 = smul.addr %s183, 8
        %s185 = scalar_lea.vmem %s0, %s184
      $region36: #{basic_block_forward.1} parent=31 // pred_fallthru
        _
    $region32: #{basic_block_forward.1} parent=5 // pred_fallthru
      _
    %p186 = scmp.le.s32.totalorder 1, %s11
    %p187 = scmp.lt.s32.totalorder %s11, 3
    %p188 = pnand %p186, %p187
    %p189 = pneg %p188
    // Predicated region
    $region37: #{basic_block_forward.1} parent=5 // pred_check
      _
    $region38: #{basic_block_forward.1} parent=5 // pred_check_branch
      %191 = sbr.rel (%p188) target = $region40
    $region39: #{basic_block_forward.1} parent=5 // pred_region
      %s192 = ssub.s32 %s11, 1
      %p193 = scmp.lt.s32.totalorder %s16, 1
      %s194 = scalar_select %p193, %s16, 1
      %s195 = smul.addr %s194, 3
      %s196 = smul.addr %s195, 8
      %s197 = scalar_lea.vmem %s0, %s196
      %p198 = pneg %p37
      %p199 = pneg %p34
      %p200 = pneg %p58
      %p201 = pneg %p55
      %p202 = pneg %p79
      %p203 = pneg %p76
      %p204 = pneg %p100
      %p205 = pneg %p97
      %p206 = pneg %p121
      %p207 = pneg %p118
      %p208 = pneg %p147
      %p209 = pneg %p144
      %p210 = scmp.lt.s32.totalorder %s16, 1
      %s211 = scalar_select %p210, %s16, 1
      %s212 = smul.addr %s211, 2
      %s213 = smul.addr %s212, 8
      %s214 = scalar_lea.vmem %s5, %s213
      %p215 = scmp.lt.s32.totalorder %s16, 1
      %s216 = scalar_select %p215, %s16, 1
      %s217 = smul.addr %s216, 3
      %s218 = smul.addr %s217, 8
      %s219 = scalar_lea.vmem %s0, %s218
      %p220 = scmp.lt.s32.totalorder %s16, 1
      %s221 = scalar_select %p220, %s16, 1
      %s222 = smul.addr %s221, 2
      %s223 = smul.addr %s222, 8
      %s224 = scalar_lea.vmem %s5, %s223
      %v225 = vld [vmem:[%s219] sm:$0xff]
      %v226 = vld [vmem:[%s219 + $0x8] sm:$0xff]
      %v227 = vld [vmem:[%s1] sm:$0xff]
      %v228 = vld [vmem:[%s1 + $0x8] sm:$0xff]
      %v229 = vld [vmem:[%s1 + $0x10] sm:$0xff]
      %v230 = vld [vmem:[%s1 + $0x18] sm:$0xff]
      %v231 = vld [vmem:[%s1 + $0x20] sm:$0xff]
      %v232 = vld [vmem:[%s1 + $0x28] sm:$0xff]
      %v233 = vld [vmem:[%s1 + $0x30] sm:$0xff]
      %v234 = vld [vmem:[%s1 + $0x38] sm:$0xff]
      %v235 = vld [vmem:[%s219 + $0x1] sm:$0xff]
      %v236 = vld [vmem:[%s219 + $0x9] sm:$0xff]
      %s237 = scalar_lea.vmem %s1, 64
      %v238 = vld [vmem:[%s237] sm:$0xff]
      %v239 = vld [vmem:[%s237 + $0x8] sm:$0xff]
      %v240 = vld [vmem:[%s237 + $0x10] sm:$0xff]
      %v241 = vld [vmem:[%s237 + $0x18] sm:$0xff]
      %v242 = vld [vmem:[%s237 + $0x20] sm:$0xff]
      %v243 = vld [vmem:[%s237 + $0x28] sm:$0xff]
      %v244 = vld [vmem:[%s237 + $0x30] sm:$0xff]
      %v245 = vld [vmem:[%s237 + $0x38] sm:$0xff]
      %vm246 = vcmask 523264
      %v248 = vsel %vm246, %v235, 0
      %v251 = vsel %vm246, %v236, 0
      %253 = vmatpush.msra.mxu0 0.0
      %254 = vmatpush.msra.mxu0 0.0
      %255 = vmatpush.msra.mxu0 0.0
      %256 = vmatpush.msra.mxu0 0.0
      %257 = vmatpush.msra.mxu0 0.0
      %258 = vmatpush.msra.mxu0 0.0
      %259 = vmatpush.msra.mxu0 0.0
      %260 = vmatpush.msra.mxu0 0.0
      %261 = vmatpush.msra.mxu0 %v245
      %262 = vmatpush.msra.mxu0 %v244
      %263 = vmatpush.msra.mxu0 %v243
      %264 = vmatpush.msra.mxu0 %v242
      %265 = vmatpush.msra.mxu0 %v241
      %266 = vmatpush.msra.mxu0 %v240
      %267 = vmatpush.msra.mxu0 %v239
      %268 = vmatpush.msra.mxu0 %v238
      %269 = vmatmul.f32.gmra.mxu0 %v248
      %v270 = vpop.f32.mrf.mxu0
      %v271 = vadd.f32 0.0, %v270
      %272 = vmatmul.f32.gmra.mxu0 %v251
      %v273 = vpop.f32.mrf.mxu0
      %v274 = vadd.f32 0.0, %v273
      %275 = vdwg.mxu0
      %v277 = vsel %vm246, %v225, 0
      %v280 = vsel %vm246, %v226, 0
      %282 = vmatpush.msra.mxu0 0.0
      %283 = vmatpush.msra.mxu0 0.0
      %284 = vmatpush.msra.mxu0 0.0
      %285 = vmatpush.msra.mxu0 0.0
      %286 = vmatpush.msra.mxu0 0.0
      %287 = vmatpush.msra.mxu0 0.0
      %288 = vmatpush.msra.mxu0 0.0
      %289 = vmatpush.msra.mxu0 0.0
      %290 = vmatpush.msra.mxu0 %v234
      %291 = vmatpush.msra.mxu0 %v233
      %292 = vmatpush.msra.mxu0 %v232
      %293 = vmatpush.msra.mxu0 %v231
      %294 = vmatpush.msra.mxu0 %v230
      %295 = vmatpush.msra.mxu0 %v229
      %296 = vmatpush.msra.mxu0 %v228
      %297 = vmatpush.msra.mxu0 %v227
      %298 = vmatmul.f32.gmra.mxu0 %v277
      %v299 = vpop.f32.mrf.mxu0
      %v300 = vadd.f32 %v271, %v299
      %301 = vmatmul.f32.gmra.mxu0 %v280
      %v302 = vpop.f32.mrf.mxu0
      %v303 = vadd.f32 %v274, %v302
      %304 = vdwg.mxu0
      %v305 = vld [vmem:[%s219 + $0x2] sm:$0xff]
      %v306 = vld [vmem:[%s219 + $0xa] sm:$0xff]
      %s307 = scalar_lea.vmem %s1, 128
      %v308 = vld [vmem:[%s307] sm:$0xff]
      %v309 = vld [vmem:[%s307 + $0x8] sm:$0xff]
      %v310 = vld [vmem:[%s307 + $0x10] sm:$0xff]
      %v311 = vld [vmem:[%s307 + $0x18] sm:$0xff]
      %v312 = vld [vmem:[%s307 + $0x20] sm:$0xff]
      %v313 = vld [vmem:[%s307 + $0x28] sm:$0xff]
      %v314 = vld [vmem:[%s307 + $0x30] sm:$0xff]
      %v315 = vld [vmem:[%s307 + $0x38] sm:$0xff]
      %v317 = vsel %vm246, %v305, 0
      %v320 = vsel %vm246, %v306, 0
      %322 = vmatpush.msra.mxu0 0.0
      %323 = vmatpush.msra.mxu0 0.0
      %324 = vmatpush.msra.mxu0 0.0
      %325 = vmatpush.msra.mxu0 0.0
      %326 = vmatpush.msra.mxu0 0.0
      %327 = vmatpush.msra.mxu0 0.0
      %328 = vmatpush.msra.mxu0 0.0
      %329 = vmatpush.msra.mxu0 0.0
      %330 = vmatpush.msra.mxu0 %v315
      %331 = vmatpush.msra.mxu0 %v314
      %332 = vmatpush.msra.mxu0 %v313
      %333 = vmatpush.msra.mxu0 %v312
      %334 = vmatpush.msra.mxu0 %v311
      %335 = vmatpush.msra.mxu0 %v310
      %336 = vmatpush.msra.mxu0 %v309
      %337 = vmatpush.msra.mxu0 %v308
      %338 = vmatmul.f32.gmra.mxu0 %v317
      %v339 = vpop.f32.mrf.mxu0
      %v340 = vadd.f32 0.0, %v339
      %341 = vmatmul.f32.gmra.mxu0 %v320
      %v342 = vpop.f32.mrf.mxu0
      %v343 = vadd.f32 0.0, %v342
      %344 = vdwg.mxu0
      %v345 = vadd.f32 %v300, %v340
      %v346 = vadd.f32 %v303, %v343
      %v347 = vld [vmem:[%s2] sm:$0x1]
      %v349 = vperm.slane %v347, 0
      %v351 = vadd.f32 %v345, %v349
      %v352 = vadd.f32 %v346, %v349
      %v353 = vmax.f32 %v351, 0.0
      %v354 = vmax.f32 %v352, 0.0
      %vm357 = vcmask 1040384
      %v358 = vrot.slane %v353, 7
      %v359 = vrot.slane %v354, 7
      %v360 = vsel %vm357, %v358, %v359
      %v364 = vsel %vm357, 0.0, %v358
      %v365 = vsel %vm357, %v359, 0.0
      %v366 = vld [vmem:[%s3] sm:$0xff]
      %v367 = vld [vmem:[%s3 + $0x8] sm:$0xff]
      %v368 = vld [vmem:[%s3 + $0x10] sm:$0xff]
      %v369 = vld [vmem:[%s3 + $0x18] sm:$0xff]
      %v370 = vld [vmem:[%s3 + $0x20] sm:$0xff]
      %v371 = vld [vmem:[%s3 + $0x28] sm:$0xff]
      %v372 = vld [vmem:[%s3 + $0x30] sm:$0xff]
      %v373 = vld [vmem:[%s3 + $0x38] sm:$0xff]
      %v374 = vld [vmem:[%s3 + $0x40] sm:$0xff]
      %v375 = vld [vmem:[%s3 + $0x48] sm:$0xff]
      %v376 = vld [vmem:[%s3 + $0x50] sm:$0xff]
      %v377 = vld [vmem:[%s3 + $0x58] sm:$0xff]
      %v378 = vld [vmem:[%s3 + $0x60] sm:$0xff]
      %v379 = vld [vmem:[%s3 + $0x68] sm:$0xff]
      %v380 = vld [vmem:[%s3 + $0x70] sm:$0xff]
      %v381 = vld [vmem:[%s3 + $0x78] sm:$0xff]
      %s382 = scalar_lea.vmem %s3, 128
      %v383 = vld [vmem:[%s382] sm:$0xff]
      %v384 = vld [vmem:[%s382 + $0x8] sm:$0xff]
      %v385 = vld [vmem:[%s382 + $0x10] sm:$0xff]
      %v386 = vld [vmem:[%s382 + $0x18] sm:$0xff]
      %v387 = vld [vmem:[%s382 + $0x20] sm:$0xff]
      %v388 = vld [vmem:[%s382 + $0x28] sm:$0xff]
      %v389 = vld [vmem:[%s382 + $0x30] sm:$0xff]
      %v390 = vld [vmem:[%s382 + $0x38] sm:$0xff]
      %v391 = vld [vmem:[%s382 + $0x40] sm:$0xff]
      %v392 = vld [vmem:[%s382 + $0x48] sm:$0xff]
      %v393 = vld [vmem:[%s382 + $0x50] sm:$0xff]
      %v394 = vld [vmem:[%s382 + $0x58] sm:$0xff]
      %v395 = vld [vmem:[%s382 + $0x60] sm:$0xff]
      %v396 = vld [vmem:[%s382 + $0x68] sm:$0xff]
      %v397 = vld [vmem:[%s382 + $0x70] sm:$0xff]
      %v398 = vld [vmem:[%s382 + $0x78] sm:$0xff]
      %vm401 = vcmask 1046528
      %v402 = vrot.slane %v364, 1
      %v403 = vrot.slane %v360, 1
      %v404 = vsel %vm401, %v402, %v403
      %v405 = vrot.slane %v365, 1
      %v406 = vsel %vm401, %v403, %v405
      %409 = vmatpush.msra.mxu0 %v398
      %410 = vmatpush.msra.mxu0 %v397
      %411 = vmatpush.msra.mxu0 %v396
      %412 = vmatpush.msra.mxu0 %v395
      %413 = vmatpush.msra.mxu0 %v394
      %414 = vmatpush.msra.mxu0 %v393
      %415 = vmatpush.msra.mxu0 %v392
      %416 = vmatpush.msra.mxu0 %v391
      %417 = vmatpush.msra.mxu0 %v390
      %418 = vmatpush.msra.mxu0 %v389
      %419 = vmatpush.msra.mxu0 %v388
      %420 = vmatpush.msra.mxu0 %v387
      %421 = vmatpush.msra.mxu0 %v386
      %422 = vmatpush.msra.mxu0 %v385
      %423 = vmatpush.msra.mxu0 %v384
      %424 = vmatpush.msra.mxu0 %v383
      %425 = vmatmul.f32.gmra.mxu0 %v404
      %v426 = vpop.f32.mrf.mxu0
      %v427 = vadd.f32 0.0, %v426
      %428 = vmatmul.f32.gmra.mxu0 %v406
      %v429 = vpop.f32.mrf.mxu0
      %v430 = vadd.f32 0.0, %v429
      %431 = vdwg.mxu0
      %432 = vmatpush.msra.mxu0 %v381
      %433 = vmatpush.msra.mxu0 %v380
      %434 = vmatpush.msra.mxu0 %v379
      %435 = vmatpush.msra.mxu0 %v378
      %436 = vmatpush.msra.mxu0 %v377
      %437 = vmatpush.msra.mxu0 %v376
      %438 = vmatpush.msra.mxu0 %v375
      %439 = vmatpush.msra.mxu0 %v374
      %440 = vmatpush.msra.mxu0 %v373
      %441 = vmatpush.msra.mxu0 %v372
      %442 = vmatpush.msra.mxu0 %v371
      %443 = vmatpush.msra.mxu0 %v370
      %444 = vmatpush.msra.mxu0 %v369
      %445 = vmatpush.msra.mxu0 %v368
      %446 = vmatpush.msra.mxu0 %v367
      %447 = vmatpush.msra.mxu0 %v366
      %448 = vmatmul.f32.gmra.mxu0 %v364
      %v449 = vpop.f32.mrf.mxu0
      %v450 = vadd.f32 %v427, %v449
      %451 = vmatmul.f32.gmra.mxu0 %v360
      %v452 = vpop.f32.mrf.mxu0
      %v453 = vadd.f32 %v430, %v452
      %454 = vdwg.mxu0
      %s455 = scalar_lea.vmem %s3, 256
      %v456 = vld [vmem:[%s455] sm:$0xff]
      %v457 = vld [vmem:[%s455 + $0x8] sm:$0xff]
      %v458 = vld [vmem:[%s455 + $0x10] sm:$0xff]
      %v459 = vld [vmem:[%s455 + $0x18] sm:$0xff]
      %v460 = vld [vmem:[%s455 + $0x20] sm:$0xff]
      %v461 = vld [vmem:[%s455 + $0x28] sm:$0xff]
      %v462 = vld [vmem:[%s455 + $0x30] sm:$0xff]
      %v463 = vld [vmem:[%s455 + $0x38] sm:$0xff]
      %v464 = vld [vmem:[%s455 + $0x40] sm:$0xff]
      %v465 = vld [vmem:[%s455 + $0x48] sm:$0xff]
      %v466 = vld [vmem:[%s455 + $0x50] sm:$0xff]
      %v467 = vld [vmem:[%s455 + $0x58] sm:$0xff]
      %v468 = vld [vmem:[%s455 + $0x60] sm:$0xff]
      %v469 = vld [vmem:[%s455 + $0x68] sm:$0xff]
      %v470 = vld [vmem:[%s455 + $0x70] sm:$0xff]
      %v471 = vld [vmem:[%s455 + $0x78] sm:$0xff]
      %vm472 = vcmask 1045504
      %v473 = vrot.slane %v364, 2
      %v474 = vrot.slane %v360, 2
      %v475 = vsel %vm472, %v473, %v474
      %v476 = vrot.slane %v365, 2
      %v477 = vsel %vm472, %v474, %v476
      %480 = vmatpush.msra.mxu0 %v471
      %481 = vmatpush.msra.mxu0 %v470
      %482 = vmatpush.msra.mxu0 %v469
      %483 = vmatpush.msra.mxu0 %v468
      %484 = vmatpush.msra.mxu0 %v467
      %485 = vmatpush.msra.mxu0 %v466
      %486 = vmatpush.msra.mxu0 %v465
      %487 = vmatpush.msra.mxu0 %v464
      %488 = vmatpush.msra.mxu0 %v463
      %489 = vmatpush.msra.mxu0 %v462
      %490 = vmatpush.msra.mxu0 %v461
      %491 = vmatpush.msra.mxu0 %v460
      %492 = vmatpush.msra.mxu0 %v459
      %493 = vmatpush.msra.mxu0 %v458
      %494 = vmatpush.msra.mxu0 %v457
      %495 = vmatpush.msra.mxu0 %v456
      %496 = vmatmul.f32.gmra.mxu0 %v475
      %v497 = vpop.f32.mrf.mxu0
      %v498 = vadd.f32 0.0, %v497
      %499 = vmatmul.f32.gmra.mxu0 %v477
      %v500 = vpop.f32.mrf.mxu0
      %v501 = vadd.f32 0.0, %v500
      %502 = vdwg.mxu0
      %v503 = vadd.f32 %v450, %v498
      %v504 = vadd.f32 %v453, %v501
      %v505 = vld [vmem:[%s4] sm:$0x1]
      %v507 = vperm.slane %v505, 0
      %v509 = vadd.f32 %v503, %v507
      %v510 = vadd.f32 %v504, %v507
      %v511 = vmax.f32 %v509, 0.0
      %v512 = vmax.f32 %v510, 0.0
      %v515 = vrot.slane %v511, 1
      %v516 = vrot.slane %v512, 1
      %v517 = vsel %vm401, %v515, %v516
      %v520 = vmax.f32 %v511, %v517
      %v521 = vmax.f32 %v512, %v516
      %524 = vrot.lane.b32.xlu0 %v520, 124
      %v525 = vpop.permute.xlu0 %524
      %526 = vrot.lane.b32.xlu0 %v521, 124
      %v527 = vpop.permute.xlu0 %526
      %v530 = vmax.f32 %v520, %v525
      %v531 = vmax.f32 %v521, %v527
      %vm532 = vcmask 490496
      %533 = vst.msk [vmem:[%s224] sm:$0xff] %vm532, %v530
      %vm534 = vcmask 489472
      %535 = vst.msk [vmem:[%s224 + $0x8] sm:$0x7f] %vm534, %v531
      %p536 = scmp.lt.s32.totalorder %s16, 1
      %s537 = scalar_select %p536, %s16, 1
      %s538 = smul.addr %s537, 2
      %s539 = smul.addr %s538, 8
      %s540 = scalar_lea.vmem %s5, %s539
      // Predicated region
      $region41: #{basic_block_forward.1} parent=39 // pred_check
        %p541 = pneg %p144
      $region42: #{basic_block_forward.1} parent=39 // pred_check_branch
        %543 = sbr.rel (%p541) target = $region44
      $region43: #{basic_block_forward.1} parent=39 // pred_region
        _
      $region44: #{basic_block_forward.1} parent=39 // pred_fallthru
        _
    $region40: #{basic_block_forward.1} parent=5 // pred_fallthru
      _
    %p544 = scmp.le.s32.totalorder 2, %s11
    // Predicated region
    $region45: #{basic_block_forward.1} parent=5 // pred_check
      %p545 = pneg %p544
    $region46: #{basic_block_forward.1} parent=5 // pred_check_branch
      %547 = sbr.rel (%p545) target = $region48
    $region47: #{basic_block_forward.1} parent=5 // pred_region
      %s548 = ssub.s32 %s11, 2
      // Predicated region
      $region49: #{basic_block_forward.1} parent=47 // pred_check
        %p549 = pneg %p150
      $region50: #{basic_block_forward.1} parent=47 // pred_check_branch
        %551 = sbr.rel (%p549) target = $region52
      $region51: #{basic_block_forward.1} parent=47 // pred_region
        %p552 = scmp.lt.s32.totalorder %s17, 1
        %s553 = scalar_select %p552, %s17, 1
        %s554 = smul.addr %s553, 2
        %s555 = smul.addr %s554, 8
        %s556 = scalar_lea.vmem %s5, %s555
      $region52: #{basic_block_forward.1} parent=47 // pred_fallthru
        _
    $region48: #{basic_block_forward.1} parent=5 // pred_fallthru
      _
  $region6: #{basic_block_forward.1} parent=0 // loop_footer
    %s15 = sadd.s32 1, %s11
  $region7: #{basic_block_forward.1} parent=0 // loop_footer_branch
    %10 = sbr.rel target = $region3
  $region8: #{basic_block_forward.1} parent=0 // loop_exit
    _

</llo_original>
